<compile_context>
chip_gen: v6e
topology: v6e:2x2x1
jax: 0.10.0
libtpu: 0.0.40
codegen_flags: <defaults>
</compile_context>

<pallas_src>
import jax
import jax.numpy as jnp
from jax.experimental import pallas as pl
from jax.experimental.pallas import tpu as pltpu


HIDDEN = 128
LANE = 128   # lane granule (batch axis)
SUB = 8      # sublane granule (feature axis padding)


def _round_up(n, m):
    return ((n + m - 1) // m) * m


def dqn_kernel(x_ref, w1_ref, b1_ref, w2_ref, b2_ref, w3_ref, b3_ref, o_ref):
    # x_ref: (n_obs_pad, tb) bf16; weights: (out, in) bf16; biases: (out, 1) f32.
    x = x_ref[...]
    # layer1 + ReLU: (H, n_obs_pad) @ (n_obs_pad, tb) -> (H, tb), f32 accumulate.
    h1 = jnp.dot(w1_ref[...], x, preferred_element_type=jnp.float32)
    h1 = jnp.maximum(h1 + b1_ref[...], 0.0)
    # layer2 + ReLU: 128x128 MXU matmul, bf16 operands, f32 accumulate.
    h2 = jnp.dot(w2_ref[...], h1.astype(jnp.bfloat16),
                 preferred_element_type=jnp.float32)
    h2 = jnp.maximum(h2 + b2_ref[...], 0.0)
    # layer3 (no activation): (n_act_pad, H) @ (H, tb) -> (n_act_pad, tb).
    out = jnp.dot(w3_ref[...], h2.astype(jnp.bfloat16),
                  preferred_element_type=jnp.float32)
    o_ref[...] = (out + b3_ref[...]).astype(o_ref.dtype)


def dqn_forward(x, kp, n_actions, *, tile_b=1024):
    """x: (B, n_observations) float32. kp: packed kernel params (see pack_params).
    Returns (B, n_actions) float32 Q-values."""
    B, n_obs = x.shape
    H, n_obs_pad = kp["w1"].shape
    n_act_pad = kp["w3"].shape[0]

    # Batch tile: multiple of 128 lanes; >= 2 grid steps whenever B > 128 so the
    # "parallel" batch axis can be sharded across v7x's two TensorCores.
    tile_b = _round_up(max(tile_b, LANE), LANE)
    tb = min(tile_b, max(LANE, _round_up(-(-B // 2), LANE)))
    b_pad = _round_up(B, tb)
    grid = (b_pad // tb,)

    # Feature-major, lane-dense activations: (n_obs_pad, b_pad) bf16.
    # (Transpose/pad/cast fuse into one small XLA copy; layout plumbing only.)
    x_t = jnp.pad(x.T.astype(jnp.bfloat16),
                  ((0, n_obs_pad - n_obs), (0, b_pad - B)))

    # Weights / biases: full-array blocks with constant index maps -> DMA'd once,
    # VMEM-resident across all batch tiles.
    def resident(a):
        return pl.BlockSpec(a.shape, lambda i: (0, 0))

    flops = 2 * b_pad * (n_obs_pad * H + H * H + H * n_act_pad)
    bytes_accessed = (
        x_t.size * 2 + n_act_pad * b_pad * 4                       # x in, q out
        + (kp["w1"].size + kp["w2"].size + kp["w3"].size) * 2      # bf16 weights
        + (kp["b1"].size + kp["b2"].size + kp["b3"].size) * 4      # f32 biases
    )

    out = pl.pallas_call(
        dqn_kernel,
        out_shape=jax.ShapeDtypeStruct((n_act_pad, b_pad), jnp.float32),
        grid=grid,
        in_specs=[
            pl.BlockSpec((n_obs_pad, tb), lambda i: (0, i)),       # x: batch-tiled
            resident(kp["w1"]), resident(kp["b1"]),
            resident(kp["w2"]), resident(kp["b2"]),
            resident(kp["w3"]), resident(kp["b3"]),
        ],
        out_specs=pl.BlockSpec((n_act_pad, tb), lambda i: (0, i)),
        compiler_params=pltpu.CompilerParams(
            dimension_semantics=("parallel",),                      # megacore on v7x
        ),
        cost_estimate=pl.CostEstimate(
            flops=flops, transcendentals=0, bytes_accessed=bytes_accessed),
    )(x_t, kp["w1"], kp["b1"], kp["w2"], kp["b2"], kp["w3"], kp["b3"])

    # Drop zero-padded action rows / garbage batch columns; back to (B, n_actions).
    return out[:n_actions, :B].T


def init_dqn_params(key, n_observations, n_actions, hidden=HIDDEN):
    """nn.Linear default init, weights in PyTorch (out_features, in_features)
    orientation, f32 (used directly by the pure-JAX references)."""
    ks = jax.random.split(key, 6)

    def linear(kw, kb, fan_in, fan_out):
        bound = 1.0 / jnp.sqrt(jnp.float32(fan_in))
        w = jax.random.uniform(kw, (fan_out, fan_in), jnp.float32, -bound, bound)
        b = jax.random.uniform(kb, (fan_out,), jnp.float32, -bound, bound)
        return w, b

    w1, b1 = linear(ks[0], ks[1], n_observations, hidden)
    w2, b2 = linear(ks[2], ks[3], hidden, hidden)
    w3, b3 = linear(ks[4], ks[5], hidden, n_actions)
    return {"w1": w1, "b1": b1, "w2": w2, "b2": b2, "w3": w3, "b3": b3}


def pack_params(p):
    """Pack f32 PyTorch-oriented params into kernel layout: bf16 weights, n_obs
    and n_actions zero-padded to the sublane granule, biases as (out, 1) f32."""
    H, n_obs = p["w1"].shape
    n_act = p["w3"].shape[0]
    n_obs_pad = _round_up(n_obs, SUB)
    n_act_pad = _round_up(n_act, SUB)
    return {
        "w1": jnp.pad(p["w1"], ((0, 0), (0, n_obs_pad - n_obs))).astype(jnp.bfloat16),
        "b1": p["b1"].reshape(H, 1),
        "w2": p["w2"].astype(jnp.bfloat16),
        "b2": p["b2"].reshape(H, 1),
        "w3": jnp.pad(p["w3"], ((0, n_act_pad - n_act), (0, 0))).astype(jnp.bfloat16),
        "b3": jnp.pad(p["b3"], (0, n_act_pad - n_act)).reshape(n_act_pad, 1),
    }


def dqn_reference(x, p):
    """Pure-f32 PyTorch-equivalent forward."""
    h1 = jnp.maximum(x @ p["w1"].T + p["b1"], 0.0)
    h2 = jnp.maximum(h1 @ p["w2"].T + p["b2"], 0.0)
    return h2 @ p["w3"].T + p["b3"]


def dqn_reference_bf16(x, p):
    """Reference performing the kernel's exact math (bf16 operands, f32 accum)."""
    def lin(a, w, b):
        return jnp.dot(a.astype(jnp.bfloat16), w.T.astype(jnp.bfloat16),
                       preferred_element_type=jnp.float32) + b
    h1 = jnp.maximum(lin(x, p["w1"], p["b1"]), 0.0)
    h2 = jnp.maximum(lin(h1, p["w2"], p["b2"]), 0.0)
    return lin(h2, p["w3"], p["b3"])


if __name__ == "__main__":
    # CartPole: n_observations=4, n_actions=2.
    n_observations, n_actions = 4, 2

    key = jax.random.PRNGKey(0)
    k_params, k_x1, k_x2 = jax.random.split(key, 3)
    params = init_dqn_params(k_params, n_observations, n_actions)
    kparams = pack_params(params)

    # Case 1: tiny action-selection batch (single grid step).
    x1 = jax.random.normal(k_x1, (8, n_observations), dtype=jnp.float32)
    q1 = jax.block_until_ready(dqn_forward(x1, kparams, n_actions))
    assert q1.shape == (8, n_actions)
    assert jnp.allclose(q1, dqn_reference_bf16(x1, params), atol=1e-4, rtol=1e-4)
    assert jnp.allclose(q1, dqn_reference(x1, params), atol=3e-2, rtol=3e-2)

    # Case 2: replay-style batch not a multiple of the tile: exercises the
    # 2-step grid (v7x two-core split), resident weights, padding/slicing path.
    x2 = jax.random.normal(k_x2, (200, n_observations), dtype=jnp.float32)
    q2 = jax.block_until_ready(dqn_forward(x2, kparams, n_actions))
    assert q2.shape == (200, n_actions)
    assert jnp.allclose(q2, dqn_reference_bf16(x2, params), atol=1e-4, rtol=1e-4)
    assert jnp.allclose(q2, dqn_reference(x2, params), atol=3e-2, rtol=3e-2)

    print("KERNEL_OK")
</pallas_src>

<mosaic_0001>
module attributes {stable_mosaic.version = 11 : i64} {
  func.func @dqn_kernel(%arg0: i32, %arg1: memref<8x128xbf16, #tpu.memory_space<vmem>>, %arg2: memref<128x8xbf16, #tpu.memory_space<vmem>>, %arg3: memref<128x1xf32, #tpu.memory_space<vmem>>, %arg4: memref<128x128xbf16, #tpu.memory_space<vmem>>, %arg5: memref<128x1xf32, #tpu.memory_space<vmem>>, %arg6: memref<8x128xbf16, #tpu.memory_space<vmem>>, %arg7: memref<8x1xf32, #tpu.memory_space<vmem>>, %arg8: memref<8x128xf32, #tpu.memory_space<vmem>>) attributes {dimension_semantics = [#tpu.dimension_semantics<parallel>], iteration_bounds = array<i64: 1>, scalar_prefetch = 0 : i64, scratch_operands = 0 : i64, tpu.core_type = #tpu.core_type<tc>, window_params = [{transform_indices = @transform_0, window_bounds = array<i64: 8, 128>}, {pipeline_mode = #tpu.pipeline_mode<synchronous>, transform_indices = @transform_1, window_bounds = array<i64: 128, 8>}, {pipeline_mode = #tpu.pipeline_mode<synchronous>, transform_indices = @transform_2, window_bounds = array<i64: 128, 1>}, {pipeline_mode = #tpu.pipeline_mode<synchronous>, transform_indices = @transform_3, window_bounds = array<i64: 128, 128>}, {pipeline_mode = #tpu.pipeline_mode<synchronous>, transform_indices = @transform_4, window_bounds = array<i64: 128, 1>}, {pipeline_mode = #tpu.pipeline_mode<synchronous>, transform_indices = @transform_5, window_bounds = array<i64: 8, 128>}, {pipeline_mode = #tpu.pipeline_mode<synchronous>, transform_indices = @transform_6, window_bounds = array<i64: 8, 1>}, {transform_indices = @transform_7, window_bounds = array<i64: 8, 128>}]} {
    %c0 = arith.constant 0 : index
    %c0_0 = arith.constant 0 : index
    %0 = vector.load %arg1[%c0, %c0_0] : memref<8x128xbf16, #tpu.memory_space<vmem>>, vector<8x128xbf16>
    %c0_1 = arith.constant 0 : index
    %c0_2 = arith.constant 0 : index
    %1 = vector.load %arg2[%c0_1, %c0_2] : memref<128x8xbf16, #tpu.memory_space<vmem>>, vector<128x8xbf16>
    %cst = arith.constant dense<0.000000e+00> : vector<128x128xf32>
    %2 = tpu.matmul %1, %0, %cst {dimension_numbers = #tpu.dot_dimension_numbers<[1], [0], [0], [1], [0, 0, 1, 1], [], []>} : vector<128x8xbf16>, vector<8x128xbf16>, vector<128x128xf32> -> vector<128x128xf32>
    %c0_3 = arith.constant 0 : index
    %c0_4 = arith.constant 0 : index
    %3 = vector.load %arg3[%c0_3, %c0_4] : memref<128x1xf32, #tpu.memory_space<vmem>>, vector<128x1xf32>
    %4 = vector.broadcast %3 : vector<128x1xf32> to vector<128x128xf32>
    %5 = arith.addf %2, %4 : vector<128x128xf32>
    %cst_5 = arith.constant 0.000000e+00 : f32
    %6 = vector.broadcast %cst_5 : f32 to vector<128x128xf32>
    %7 = arith.maximumf %5, %6 : vector<128x128xf32>
    %c0_6 = arith.constant 0 : index
    %c0_7 = arith.constant 0 : index
    %8 = vector.load %arg4[%c0_6, %c0_7] : memref<128x128xbf16, #tpu.memory_space<vmem>>, vector<128x128xbf16>
    %9 = arith.truncf %7 : vector<128x128xf32> to vector<128x128xbf16>
    %cst_8 = arith.constant dense<0.000000e+00> : vector<128x128xf32>
    %10 = tpu.matmul %8, %9, %cst_8 {dimension_numbers = #tpu.dot_dimension_numbers<[1], [0], [0], [1], [0, 0, 1, 1], [], []>} : vector<128x128xbf16>, vector<128x128xbf16>, vector<128x128xf32> -> vector<128x128xf32>
    %c0_9 = arith.constant 0 : index
    %c0_10 = arith.constant 0 : index
    %11 = vector.load %arg5[%c0_9, %c0_10] : memref<128x1xf32, #tpu.memory_space<vmem>>, vector<128x1xf32>
    %12 = vector.broadcast %11 : vector<128x1xf32> to vector<128x128xf32>
    %13 = arith.addf %10, %12 : vector<128x128xf32>
    %cst_11 = arith.constant 0.000000e+00 : f32
    %14 = vector.broadcast %cst_11 : f32 to vector<128x128xf32>
    %15 = arith.maximumf %13, %14 : vector<128x128xf32>
    %c0_12 = arith.constant 0 : index
    %c0_13 = arith.constant 0 : index
    %16 = vector.load %arg6[%c0_12, %c0_13] : memref<8x128xbf16, #tpu.memory_space<vmem>>, vector<8x128xbf16>
    %17 = arith.truncf %15 : vector<128x128xf32> to vector<128x128xbf16>
    %cst_14 = arith.constant dense<0.000000e+00> : vector<8x128xf32>
    %18 = tpu.matmul %16, %17, %cst_14 {dimension_numbers = #tpu.dot_dimension_numbers<[1], [0], [0], [1], [0, 0, 1, 1], [], []>} : vector<8x128xbf16>, vector<128x128xbf16>, vector<8x128xf32> -> vector<8x128xf32>
    %c0_15 = arith.constant 0 : index
    %c0_16 = arith.constant 0 : index
    %19 = vector.load %arg7[%c0_15, %c0_16] : memref<8x1xf32, #tpu.memory_space<vmem>>, vector<8x1xf32>
    %20 = vector.broadcast %19 : vector<8x1xf32> to vector<8x128xf32>
    %21 = arith.addf %18, %20 : vector<8x128xf32>
    %c0_17 = arith.constant 0 : index
    %c0_18 = arith.constant 0 : index
    %22 = vector.load %arg8[%c0_17, %c0_18] : memref<8x128xf32, #tpu.memory_space<vmem>>, vector<8x128xf32>
    tpu.vector_store %arg8[%c0_17, %c0_18], %21 {strides = array<i32>} : memref<8x128xf32, #tpu.memory_space<vmem>>, vector<8x128xf32>,
    return
  }
  func.func @transform_0(%arg0: i32) -> (i32, i32) {
    %c0_i32 = arith.constant 0 : i32
    %c0_i32_0 = arith.constant 0 : i32
    return %c0_i32, %arg0 : i32, i32
  }
  func.func @transform_1(%arg0: i32) -> (i32, i32) {
    %c0_i32 = arith.constant 0 : i32
    %c0_i32_0 = arith.constant 0 : i32
    %c0_i32_1 = arith.constant 0 : i32
    return %c0_i32, %c0_i32_0 : i32, i32
  }
  func.func @transform_2(%arg0: i32) -> (i32, i32) {
    %c0_i32 = arith.constant 0 : i32
    %c0_i32_0 = arith.constant 0 : i32
    %c0_i32_1 = arith.constant 0 : i32
    return %c0_i32, %c0_i32_0 : i32, i32
  }
  func.func @transform_3(%arg0: i32) -> (i32, i32) {
    %c0_i32 = arith.constant 0 : i32
    %c0_i32_0 = arith.constant 0 : i32
    %c0_i32_1 = arith.constant 0 : i32
    return %c0_i32, %c0_i32_0 : i32, i32
  }
  func.func @transform_4(%arg0: i32) -> (i32, i32) {
    %c0_i32 = arith.constant 0 : i32
    %c0_i32_0 = arith.constant 0 : i32
    %c0_i32_1 = arith.constant 0 : i32
    return %c0_i32, %c0_i32_0 : i32, i32
  }
  func.func @transform_5(%arg0: i32) -> (i32, i32) {
    %c0_i32 = arith.constant 0 : i32
    %c0_i32_0 = arith.constant 0 : i32
    %c0_i32_1 = arith.constant 0 : i32
    return %c0_i32, %c0_i32_0 : i32, i32
  }
  func.func @transform_6(%arg0: i32) -> (i32, i32) {
    %c0_i32 = arith.constant 0 : i32
    %c0_i32_0 = arith.constant 0 : i32
    %c0_i32_1 = arith.constant 0 : i32
    return %c0_i32, %c0_i32_0 : i32, i32
  }
  func.func @transform_7(%arg0: i32) -> (i32, i32) {
    %c0_i32 = arith.constant 0 : i32
    %c0_i32_0 = arith.constant 0 : i32
    return %c0_i32, %arg0 : i32, i32
  }
}

</mosaic_0001>

<llo_original>
// kernel: tpu_custom_call.1
$region0: #{tpu_custom_call.1}
  #allocation0 [shape = 'u32[]', space=smem, size = 0x4, offset = 0x4, fixed_abs, tag = 'smem constant byte address 0x4 - core index']
  #allocation1 [shape = 'u32[144,128]{1,0:T(1,128)}', space=vmem, size = 0x12000, scoped, tag = 'internal scratch']
  %s0 = inlined_call_operand.vmem [shape: bf16[8,128], index: 0, kind: input, shape index: {}]
  %s1 = inlined_call_operand.vmem [shape: bf16[128,8], index: 1, kind: input, shape index: {}]
  %s2 = inlined_call_operand.vmem [shape: f32[128,1], index: 2, kind: input, shape index: {}]
  %s3 = inlined_call_operand.vmem [shape: bf16[128,128], index: 3, kind: input, shape index: {}]
  %s4 = inlined_call_operand.vmem [shape: f32[128,1], index: 4, kind: input, shape index: {}]
  %s5 = inlined_call_operand.vmem [shape: bf16[8,128], index: 5, kind: input, shape index: {}]
  %s6 = inlined_call_operand.vmem [shape: f32[8,1], index: 6, kind: input, shape index: {}]
  %s7 = inlined_call_operand.hbm [shape: f32[8,128], index: 7, kind: output, shape index: {}]
  %s8 = sld [smem:[#allocation0]]
  $region38: #{tpu_custom_call.1} parent=0
    _
  %s10 = ssub.s32 1, %s8
  %s11 = scalar_select 0, %s10, %s8
  $region1: #{tpu_custom_call.1} parent=0
    #allocation2 [shape = 'u8[4096]{0}', space=vmem, size = 0x1000, scoped, tag = 'output window, operand 0, single buffered']
    #allocation3 [shape = 's32[1]{0}', space=sflag, size = 0x4, scoped, tag = 'scoped memory for tpu_custom_call.1']
    %12 = vsyncpa [#allocation3], 0
    // Predicated region
    $region2: #{tpu_custom_call.1} parent=1 // pred_check
      _
    $region3: #{tpu_custom_call.1} parent=1 // pred_check_branch
      %14 = sbr.rel (0) target = $region5
    $region4: #{tpu_custom_call.1} parent=1 // pred_region
      _
    $region5: #{tpu_custom_call.1} parent=1 // pred_fallthru
      _
    // Predicated region
    $region6: #{tpu_custom_call.1} parent=1 // pred_check
      _
    $region7: #{tpu_custom_call.1} parent=1 // pred_check_branch
      %16 = sbr.rel (0) target = $region9
    $region8: #{tpu_custom_call.1} parent=1 // pred_region
      _
    $region9: #{tpu_custom_call.1} parent=1 // pred_fallthru
      _
    // Predicated region
    $region10: #{tpu_custom_call.1} parent=1 // pred_check
      _
    $region11: #{tpu_custom_call.1} parent=1 // pred_check_branch
      %18 = sbr.rel (0) target = $region13
    $region12: #{tpu_custom_call.1} parent=1 // pred_region
      _
    $region13: #{tpu_custom_call.1} parent=1 // pred_fallthru
      _
    // Predicated region
    $region14: #{tpu_custom_call.1} parent=1 // pred_check
      _
    $region15: #{tpu_custom_call.1} parent=1 // pred_check_branch
      %20 = sbr.rel (0) target = $region17
    $region16: #{tpu_custom_call.1} parent=1 // pred_region
      _
    $region17: #{tpu_custom_call.1} parent=1 // pred_fallthru
      _
    // Predicated region
    $region18: #{tpu_custom_call.1} parent=1 // pred_check
      _
    $region19: #{tpu_custom_call.1} parent=1 // pred_check_branch
      %22 = sbr.rel (0) target = $region21
    $region20: #{tpu_custom_call.1} parent=1 // pred_region
      _
    $region21: #{tpu_custom_call.1} parent=1 // pred_fallthru
      _
    // Predicated region
    $region22: #{tpu_custom_call.1} parent=1 // pred_check
      _
    $region23: #{tpu_custom_call.1} parent=1 // pred_check_branch
      %24 = sbr.rel (0) target = $region25
    $region24: #{tpu_custom_call.1} parent=1 // pred_region
      _
    $region25: #{tpu_custom_call.1} parent=1 // pred_fallthru
      _
    // Predicated region
    $region26: #{tpu_custom_call.1} parent=1 // pred_check
      _
    $region27: #{tpu_custom_call.1} parent=1 // pred_check_branch
      %26 = sbr.rel (0) target = $region29
    $region28: #{tpu_custom_call.1} parent=1 // pred_region
      _
    $region29: #{tpu_custom_call.1} parent=1 // pred_fallthru
      _
    %v28 = vld [vmem:[%s0] sm:$0xf]
    %v29 = vld [vmem:[%s1] sm:$0xf]
    %v30 = vld [vmem:[%s1 + $0x4] sm:$0xf]
    %v31 = vld [vmem:[%s1 + $0x8] sm:$0xf]
    %v32 = vld [vmem:[%s1 + $0xc] sm:$0xf]
    %v33 = vld [vmem:[%s1 + $0x10] sm:$0xf]
    %v34 = vld [vmem:[%s1 + $0x14] sm:$0xf]
    %v35 = vld [vmem:[%s1 + $0x18] sm:$0xf]
    %v36 = vld [vmem:[%s1 + $0x1c] sm:$0xf]
    %v37 = vld [vmem:[%s1 + $0x20] sm:$0xf]
    %v38 = vld [vmem:[%s1 + $0x24] sm:$0xf]
    %v39 = vld [vmem:[%s1 + $0x28] sm:$0xf]
    %v40 = vld [vmem:[%s1 + $0x2c] sm:$0xf]
    %v41 = vld [vmem:[%s1 + $0x30] sm:$0xf]
    %v42 = vld [vmem:[%s1 + $0x34] sm:$0xf]
    %v43 = vld [vmem:[%s1 + $0x38] sm:$0xf]
    %v44 = vld [vmem:[%s1 + $0x3c] sm:$0xf]
    %v45 = vld [vmem:[%s2] sm:$0xff]
    %v46 = vld [vmem:[%s2 + $0x8] sm:$0xff]
    %v47 = vld [vmem:[%s2 + $0x10] sm:$0xff]
    %v48 = vld [vmem:[%s2 + $0x18] sm:$0xff]
    %v49 = vld [vmem:[%s2 + $0x20] sm:$0xff]
    %v50 = vld [vmem:[%s2 + $0x28] sm:$0xff]
    %v51 = vld [vmem:[%s2 + $0x30] sm:$0xff]
    %v52 = vld [vmem:[%s2 + $0x38] sm:$0xff]
    %v53 = vld [vmem:[%s2 + $0x40] sm:$0xff]
    %v54 = vld [vmem:[%s2 + $0x48] sm:$0xff]
    %v55 = vld [vmem:[%s2 + $0x50] sm:$0xff]
    %v56 = vld [vmem:[%s2 + $0x58] sm:$0xff]
    %v57 = vld [vmem:[%s2 + $0x60] sm:$0xff]
    %v58 = vld [vmem:[%s2 + $0x68] sm:$0xff]
    %v59 = vld [vmem:[%s2 + $0x70] sm:$0xff]
    %v60 = vld [vmem:[%s2 + $0x78] sm:$0xff]
    %62 = vset.pattern.permute.xlu0 0
    %63 = vperm.xlu0 %62, %v45
    %v64 = vpop.permute.xlu0 %63
    %67 = vset.pattern.permute.xlu0 0
    %68 = vperm.xlu0 %67, %v46
    %v69 = vpop.permute.xlu0 %68
    %72 = vset.pattern.permute.xlu0 0
    %73 = vperm.xlu0 %72, %v47
    %v74 = vpop.permute.xlu0 %73
    %77 = vset.pattern.permute.xlu0 0
    %78 = vperm.xlu0 %77, %v48
    %v79 = vpop.permute.xlu0 %78
    %82 = vset.pattern.permute.xlu0 0
    %83 = vperm.xlu0 %82, %v49
    %v84 = vpop.permute.xlu0 %83
    %87 = vset.pattern.permute.xlu0 0
    %88 = vperm.xlu0 %87, %v50
    %v89 = vpop.permute.xlu0 %88
    %92 = vset.pattern.permute.xlu0 0
    %93 = vperm.xlu0 %92, %v51
    %v94 = vpop.permute.xlu0 %93
    %97 = vset.pattern.permute.xlu0 0
    %98 = vperm.xlu0 %97, %v52
    %v99 = vpop.permute.xlu0 %98
    %102 = vset.pattern.permute.xlu0 0
    %103 = vperm.xlu0 %102, %v53
    %v104 = vpop.permute.xlu0 %103
    %107 = vset.pattern.permute.xlu0 0
    %108 = vperm.xlu0 %107, %v54
    %v109 = vpop.permute.xlu0 %108
    %112 = vset.pattern.permute.xlu0 0
    %113 = vperm.xlu0 %112, %v55
    %v114 = vpop.permute.xlu0 %113
    %117 = vset.pattern.permute.xlu0 0
    %118 = vperm.xlu0 %117, %v56
    %v119 = vpop.permute.xlu0 %118
    %122 = vset.pattern.permute.xlu0 0
    %123 = vperm.xlu0 %122, %v57
    %v124 = vpop.permute.xlu0 %123
    %127 = vset.pattern.permute.xlu0 0
    %128 = vperm.xlu0 %127, %v58
    %v129 = vpop.permute.xlu0 %128
    %132 = vset.pattern.permute.xlu0 0
    %133 = vperm.xlu0 %132, %v59
    %v134 = vpop.permute.xlu0 %133
    %137 = vset.pattern.permute.xlu0 0
    %138 = vperm.xlu0 %137, %v60
    %v139 = vpop.permute.xlu0 %138
    %v157 = vunpack.c.l.b16 %v29
    %v158 = vunpack.c.l.b16 %v30
    %v159 = vunpack.c.l.b16 %v31
    %v160 = vunpack.c.l.b16 %v32
    %v161 = vunpack.c.l.b16 %v33
    %v162 = vunpack.c.l.b16 %v34
    %v163 = vunpack.c.l.b16 %v35
    %v164 = vunpack.c.l.b16 %v36
    %v165 = vunpack.c.l.b16 %v37
    %v166 = vunpack.c.l.b16 %v38
    %v167 = vunpack.c.l.b16 %v39
    %v168 = vunpack.c.l.b16 %v40
    %v169 = vunpack.c.l.b16 %v41
    %v170 = vunpack.c.l.b16 %v42
    %v171 = vunpack.c.l.b16 %v43
    %v172 = vunpack.c.l.b16 %v44
    %v173 = vpack.c.b16 %v158, %v157
    %v174 = vpack.c.b16 %v160, %v159
    %v175 = vpack.c.b16 %v162, %v161
    %v176 = vpack.c.b16 %v164, %v163
    %v177 = vpack.c.b16 %v166, %v165
    %v178 = vpack.c.b16 %v168, %v167
    %v179 = vpack.c.b16 %v170, %v169
    %v180 = vpack.c.b16 %v172, %v171
    %vm181 = vcmask 64512
    %v183 = vsel %vm181, %v173, 0
    %v186 = vsel %vm181, %v174, 0
    %v189 = vsel %vm181, %v175, 0
    %v192 = vsel %vm181, %v176, 0
    %v195 = vsel %vm181, %v177, 0
    %v198 = vsel %vm181, %v178, 0
    %v201 = vsel %vm181, %v179, 0
    %v204 = vsel %vm181, %v180, 0
    %vm206 = vcmask 1043456
    %v208 = vsel %vm206, %v28, 0
    %210 = vmatprep.subr.bf16.mxu0 0
    %211 = vmatpush1.bf16.msra.mxu0 0
    %212 = vmatprep.subr.bf16.mxu0 0
    %213 = vmatpush1.bf16.msra.mxu0 0
    %214 = vmatprep.subr.bf16.mxu0 0
    %215 = vmatpush1.bf16.msra.mxu0 0
    %216 = vmatprep.subr.bf16.mxu0 0
    %217 = vmatpush1.bf16.msra.mxu0 0
    %218 = vmatprep.subr.bf16.mxu0 0
    %219 = vmatpush1.bf16.msra.mxu0 0
    %220 = vmatprep.subr.bf16.mxu0 0
    %221 = vmatpush1.bf16.msra.mxu0 0
    %222 = vmatprep.subr.bf16.mxu0 0
    %223 = vmatpush1.bf16.msra.mxu0 0
    %224 = vmatprep.subr.bf16.mxu0 0
    %225 = vmatpush1.bf16.msra.mxu0 %v208
    %226 = vmatprep.subr.bf16.mxu0 0
    %227 = vmatpush2.bf16.msra.mxu0 0
    %228 = vmatprep.subr.bf16.mxu0 0
    %229 = vmatpush2.bf16.msra.mxu0 0
    %230 = vmatprep.subr.bf16.mxu0 0
    %231 = vmatpush2.bf16.msra.mxu0 0
    %232 = vmatprep.subr.bf16.mxu0 0
    %233 = vmatpush2.bf16.msra.mxu0 0
    %234 = vmatprep.subr.bf16.mxu0 0
    %235 = vmatpush2.bf16.msra.mxu0 0
    %236 = vmatprep.subr.bf16.mxu0 0
    %237 = vmatpush2.bf16.msra.mxu0 0
    %238 = vmatprep.subr.bf16.mxu0 0
    %239 = vmatpush2.bf16.msra.mxu0 0
    %240 = vmatprep.subr.bf16.mxu0 0
    %241 = vmatpush2.bf16.msra.mxu0 0
    %242 = vmatprep.mubr.bf16.mxu0 0
    %243 = vmatmul.mubr.bf16.gmra.mxu0 %v183
    %v244 = vpop.f32.mrf.mxu0
    %v245 = vadd.f32 %v64, %v244
    %v246 = vpop.f32.mrf.mxu0
    %v247 = vpop.f32.mrf.mxu0
    %v248 = vadd.f32 %v69, %v247
    %v249 = vpop.f32.mrf.mxu0
    %250 = vmatprep.mubr.bf16.mxu0 0
    %251 = vmatmul.mubr.bf16.gmra.mxu0 %v186
    %v252 = vpop.f32.mrf.mxu0
    %v253 = vadd.f32 %v74, %v252
    %v254 = vpop.f32.mrf.mxu0
    %v255 = vpop.f32.mrf.mxu0
    %v256 = vadd.f32 %v79, %v255
    %v257 = vpop.f32.mrf.mxu0
    %258 = vmatprep.mubr.bf16.mxu0 0
    %259 = vmatmul.mubr.bf16.gmra.mxu0 %v189
    %v260 = vpop.f32.mrf.mxu0
    %v261 = vadd.f32 %v84, %v260
    %v262 = vpop.f32.mrf.mxu0
    %v263 = vpop.f32.mrf.mxu0
    %v264 = vadd.f32 %v89, %v263
    %v265 = vpop.f32.mrf.mxu0
    %266 = vmatprep.mubr.bf16.mxu0 0
    %267 = vmatmul.mubr.bf16.gmra.mxu0 %v192
    %v268 = vpop.f32.mrf.mxu0
    %v269 = vadd.f32 %v94, %v268
    %v270 = vpop.f32.mrf.mxu0
    %v271 = vpop.f32.mrf.mxu0
    %v272 = vadd.f32 %v99, %v271
    %v273 = vpop.f32.mrf.mxu0
    %274 = vmatprep.mubr.bf16.mxu0 0
    %275 = vmatmul.mubr.bf16.gmra.mxu0 %v195
    %v276 = vpop.f32.mrf.mxu0
    %v277 = vadd.f32 %v104, %v276
    %v278 = vpop.f32.mrf.mxu0
    %v279 = vpop.f32.mrf.mxu0
    %v280 = vadd.f32 %v109, %v279
    %v281 = vpop.f32.mrf.mxu0
    %282 = vmatprep.mubr.bf16.mxu0 0
    %283 = vmatmul.mubr.bf16.gmra.mxu0 %v198
    %v284 = vpop.f32.mrf.mxu0
    %v285 = vadd.f32 %v114, %v284
    %v286 = vpop.f32.mrf.mxu0
    %v287 = vpop.f32.mrf.mxu0
    %v288 = vadd.f32 %v119, %v287
    %v289 = vpop.f32.mrf.mxu0
    %290 = vmatprep.mubr.bf16.mxu0 0
    %291 = vmatmul.mubr.bf16.gmra.mxu0 %v201
    %v292 = vpop.f32.mrf.mxu0
    %v293 = vadd.f32 %v124, %v292
    %v294 = vpop.f32.mrf.mxu0
    %v295 = vpop.f32.mrf.mxu0
    %v296 = vadd.f32 %v129, %v295
    %v297 = vpop.f32.mrf.mxu0
    %298 = vmatprep.mubr.bf16.mxu0 0
    %299 = vmatmul.mubr.bf16.gmra.mxu0 %v204
    %v300 = vpop.f32.mrf.mxu0
    %v301 = vadd.f32 %v134, %v300
    %v302 = vpop.f32.mrf.mxu0
    %v303 = vpop.f32.mrf.mxu0
    %v304 = vadd.f32 %v139, %v303
    %v305 = vpop.f32.mrf.mxu0
    %306 = vdwg.mxu0
    %v307 = vmax.f32 %v245, 0.0
    %v308 = vmax.f32 %v248, 0.0
    %v309 = vmax.f32 %v253, 0.0
    %v310 = vmax.f32 %v256, 0.0
    %v311 = vmax.f32 %v261, 0.0
    %v312 = vmax.f32 %v264, 0.0
    %v313 = vmax.f32 %v269, 0.0
    %v314 = vmax.f32 %v272, 0.0
    %v315 = vmax.f32 %v277, 0.0
    %v316 = vmax.f32 %v280, 0.0
    %v317 = vmax.f32 %v285, 0.0
    %v318 = vmax.f32 %v288, 0.0
    %v319 = vmax.f32 %v293, 0.0
    %v320 = vmax.f32 %v296, 0.0
    %v321 = vmax.f32 %v301, 0.0
    %v322 = vmax.f32 %v304, 0.0
    %v323 = vld [vmem:[%s3] sm:$0xf]
    %v324 = vld [vmem:[%s3 + $0x4] sm:$0xf]
    %v325 = vld [vmem:[%s3 + $0x8] sm:$0xf]
    %v326 = vld [vmem:[%s3 + $0xc] sm:$0xf]
    %v327 = vld [vmem:[%s3 + $0x10] sm:$0xf]
    %v328 = vld [vmem:[%s3 + $0x14] sm:$0xf]
    %v329 = vld [vmem:[%s3 + $0x18] sm:$0xf]
    %v330 = vld [vmem:[%s3 + $0x1c] sm:$0xf]
    %v331 = vld [vmem:[%s3 + $0x20] sm:$0xf]
    %v332 = vld [vmem:[%s3 + $0x24] sm:$0xf]
    %v333 = vld [vmem:[%s3 + $0x28] sm:$0xf]
    %v334 = vld [vmem:[%s3 + $0x2c] sm:$0xf]
    %v335 = vld [vmem:[%s3 + $0x30] sm:$0xf]
    %v336 = vld [vmem:[%s3 + $0x34] sm:$0xf]
    %v337 = vld [vmem:[%s3 + $0x38] sm:$0xf]
    %v338 = vld [vmem:[%s3 + $0x3c] sm:$0xf]
    %v339 = vpack.c.bf16 %v308, %v307
    %v340 = vpack.c.bf16 %v310, %v309
    %v341 = vpack.c.bf16 %v312, %v311
    %v342 = vpack.c.bf16 %v314, %v313
    %v343 = vpack.c.bf16 %v316, %v315
    %v344 = vpack.c.bf16 %v318, %v317
    %v345 = vpack.c.bf16 %v320, %v319
    %v346 = vpack.c.bf16 %v322, %v321
    %v347 = vld [vmem:[%s4] sm:$0xff]
    %v348 = vld [vmem:[%s4 + $0x8] sm:$0xff]
    %v349 = vld [vmem:[%s4 + $0x10] sm:$0xff]
    %v350 = vld [vmem:[%s4 + $0x18] sm:$0xff]
    %v351 = vld [vmem:[%s4 + $0x20] sm:$0xff]
    %v352 = vld [vmem:[%s4 + $0x28] sm:$0xff]
    %v353 = vld [vmem:[%s4 + $0x30] sm:$0xff]
    %v354 = vld [vmem:[%s4 + $0x38] sm:$0xff]
    %v355 = vld [vmem:[%s4 + $0x40] sm:$0xff]
    %v356 = vld [vmem:[%s4 + $0x48] sm:$0xff]
    %v357 = vld [vmem:[%s4 + $0x50] sm:$0xff]
    %v358 = vld [vmem:[%s4 + $0x58] sm:$0xff]
    %v359 = vld [vmem:[%s4 + $0x60] sm:$0xff]
    %v360 = vld [vmem:[%s4 + $0x68] sm:$0xff]
    %v361 = vld [vmem:[%s4 + $0x70] sm:$0xff]
    %v362 = vld [vmem:[%s4 + $0x78] sm:$0xff]
    %364 = vset.pattern.permute.xlu0 0
    %365 = vperm.xlu0 %364, %v347
    %v366 = vpop.permute.xlu0 %365
    %369 = vset.pattern.permute.xlu0 0
    %370 = vperm.xlu0 %369, %v348
    %v371 = vpop.permute.xlu0 %370
    %374 = vset.pattern.permute.xlu0 0
    %375 = vperm.xlu0 %374, %v349
    %v376 = vpop.permute.xlu0 %375
    %379 = vset.pattern.permute.xlu0 0
    %380 = vperm.xlu0 %379, %v350
    %v381 = vpop.permute.xlu0 %380
    %384 = vset.pattern.permute.xlu0 0
    %385 = vperm.xlu0 %384, %v351
    %v386 = vpop.permute.xlu0 %385
    %389 = vset.pattern.permute.xlu0 0
    %390 = vperm.xlu0 %389, %v352
    %v391 = vpop.permute.xlu0 %390
    %394 = vset.pattern.permute.xlu0 0
    %395 = vperm.xlu0 %394, %v353
    %v396 = vpop.permute.xlu0 %395
    %399 = vset.pattern.permute.xlu0 0
    %400 = vperm.xlu0 %399, %v354
    %v401 = vpop.permute.xlu0 %400
    %404 = vset.pattern.permute.xlu0 0
    %405 = vperm.xlu0 %404, %v355
    %v406 = vpop.permute.xlu0 %405
    %409 = vset.pattern.permute.xlu0 0
    %410 = vperm.xlu0 %409, %v356
    %v411 = vpop.permute.xlu0 %410
    %414 = vset.pattern.permute.xlu0 0
    %415 = vperm.xlu0 %414, %v357
    %v416 = vpop.permute.xlu0 %415
    %419 = vset.pattern.permute.xlu0 0
    %420 = vperm.xlu0 %419, %v358
    %v421 = vpop.permute.xlu0 %420
    %424 = vset.pattern.permute.xlu0 0
    %425 = vperm.xlu0 %424, %v359
    %v426 = vpop.permute.xlu0 %425
    %429 = vset.pattern.permute.xlu0 0
    %430 = vperm.xlu0 %429, %v360
    %v431 = vpop.permute.xlu0 %430
    %434 = vset.pattern.permute.xlu0 0
    %435 = vperm.xlu0 %434, %v361
    %v436 = vpop.permute.xlu0 %435
    %439 = vset.pattern.permute.xlu0 0
    %440 = vperm.xlu0 %439, %v362
    %v441 = vpop.permute.xlu0 %440
    %v459 = vunpack.c.l.b16 %v323
    %v460 = vunpack.c.l.b16 %v324
    %v461 = vunpack.c.l.b16 %v325
    %v462 = vunpack.c.l.b16 %v326
    %v463 = vunpack.c.l.b16 %v327
    %v464 = vunpack.c.l.b16 %v328
    %v465 = vunpack.c.l.b16 %v329
    %v466 = vunpack.c.l.b16 %v330
    %v467 = vunpack.c.l.b16 %v331
    %v468 = vunpack.c.l.b16 %v332
    %v469 = vunpack.c.l.b16 %v333
    %v470 = vunpack.c.l.b16 %v334
    %v471 = vunpack.c.l.b16 %v335
    %v472 = vunpack.c.l.b16 %v336
    %v473 = vunpack.c.l.b16 %v337
    %v474 = vunpack.c.l.b16 %v338
    %v475 = vpack.c.b16 %v460, %v459
    %v476 = vpack.c.b16 %v462, %v461
    %v477 = vpack.c.b16 %v464, %v463
    %v478 = vpack.c.b16 %v466, %v465
    %v479 = vpack.c.b16 %v468, %v467
    %v480 = vpack.c.b16 %v470, %v469
    %v481 = vpack.c.b16 %v472, %v471
    %v482 = vpack.c.b16 %v474, %v473
    %491 = vmatprep.subr.bf16.mxu0 0
    %492 = vmatpush1.bf16.msra.mxu0 %v346
    %493 = vmatprep.subr.bf16.mxu0 0
    %494 = vmatpush1.bf16.msra.mxu0 %v345
    %495 = vmatprep.subr.bf16.mxu0 0
    %496 = vmatpush1.bf16.msra.mxu0 %v344
    %497 = vmatprep.subr.bf16.mxu0 0
    %498 = vmatpush1.bf16.msra.mxu0 %v343
    %499 = vmatprep.subr.bf16.mxu0 0
    %500 = vmatpush1.bf16.msra.mxu0 %v342
    %501 = vmatprep.subr.bf16.mxu0 0
    %502 = vmatpush1.bf16.msra.mxu0 %v341
    %503 = vmatprep.subr.bf16.mxu0 0
    %504 = vmatpush1.bf16.msra.mxu0 %v340
    %505 = vmatprep.subr.bf16.mxu0 0
    %506 = vmatpush1.bf16.msra.mxu0 %v339
    %507 = vmatprep.subr.bf16.mxu0 0
    %508 = vmatpush2.bf16.msra.mxu0 0
    %509 = vmatprep.subr.bf16.mxu0 0
    %510 = vmatpush2.bf16.msra.mxu0 0
    %511 = vmatprep.subr.bf16.mxu0 0
    %512 = vmatpush2.bf16.msra.mxu0 0
    %513 = vmatprep.subr.bf16.mxu0 0
    %514 = vmatpush2.bf16.msra.mxu0 0
    %515 = vmatprep.subr.bf16.mxu0 0
    %516 = vmatpush2.bf16.msra.mxu0 0
    %517 = vmatprep.subr.bf16.mxu0 0
    %518 = vmatpush2.bf16.msra.mxu0 0
    %519 = vmatprep.subr.bf16.mxu0 0
    %520 = vmatpush2.bf16.msra.mxu0 0
    %521 = vmatprep.subr.bf16.mxu0 0
    %522 = vmatpush2.bf16.msra.mxu0 0
    %523 = vmatprep.mubr.bf16.mxu0 0
    %524 = vmatmul.mubr.bf16.gmra.mxu0 %v475
    %v525 = vpop.f32.mrf.mxu0
    %v526 = vadd.f32 %v366, %v525
    %v527 = vpop.f32.mrf.mxu0
    %v528 = vpop.f32.mrf.mxu0
    %v529 = vadd.f32 %v371, %v528
    %v530 = vpop.f32.mrf.mxu0
    %531 = vmatprep.mubr.bf16.mxu0 0
    %532 = vmatmul.mubr.bf16.gmra.mxu0 %v476
    %v533 = vpop.f32.mrf.mxu0
    %v534 = vadd.f32 %v376, %v533
    %v535 = vpop.f32.mrf.mxu0
    %v536 = vpop.f32.mrf.mxu0
    %v537 = vadd.f32 %v381, %v536
    %v538 = vpop.f32.mrf.mxu0
    %539 = vmatprep.mubr.bf16.mxu0 0
    %540 = vmatmul.mubr.bf16.gmra.mxu0 %v477
    %v541 = vpop.f32.mrf.mxu0
    %v542 = vadd.f32 %v386, %v541
    %v543 = vpop.f32.mrf.mxu0
    %v544 = vpop.f32.mrf.mxu0
    %v545 = vadd.f32 %v391, %v544
    %v546 = vpop.f32.mrf.mxu0
    %547 = vmatprep.mubr.bf16.mxu0 0
    %548 = vmatmul.mubr.bf16.gmra.mxu0 %v478
    %v549 = vpop.f32.mrf.mxu0
    %v550 = vadd.f32 %v396, %v549
    %v551 = vpop.f32.mrf.mxu0
    %v552 = vpop.f32.mrf.mxu0
    %v553 = vadd.f32 %v401, %v552
    %v554 = vpop.f32.mrf.mxu0
    %555 = vmatprep.mubr.bf16.mxu0 0
    %556 = vmatmul.mubr.bf16.gmra.mxu0 %v479
    %v557 = vpop.f32.mrf.mxu0
    %v558 = vadd.f32 %v406, %v557
    %v559 = vpop.f32.mrf.mxu0
    %v560 = vpop.f32.mrf.mxu0
    %v561 = vadd.f32 %v411, %v560
    %v562 = vpop.f32.mrf.mxu0
    %563 = vmatprep.mubr.bf16.mxu0 0
    %564 = vmatmul.mubr.bf16.gmra.mxu0 %v480
    %v565 = vpop.f32.mrf.mxu0
    %v566 = vadd.f32 %v416, %v565
    %v567 = vpop.f32.mrf.mxu0
    %v568 = vpop.f32.mrf.mxu0
    %v569 = vadd.f32 %v421, %v568
    %v570 = vpop.f32.mrf.mxu0
    %571 = vmatprep.mubr.bf16.mxu0 0
    %572 = vmatmul.mubr.bf16.gmra.mxu0 %v481
    %v573 = vpop.f32.mrf.mxu0
    %v574 = vadd.f32 %v426, %v573
    %v575 = vpop.f32.mrf.mxu0
    %v576 = vpop.f32.mrf.mxu0
    %v577 = vadd.f32 %v431, %v576
    %v578 = vpop.f32.mrf.mxu0
    %579 = vmatprep.mubr.bf16.mxu0 0
    %580 = vmatmul.mubr.bf16.gmra.mxu0 %v482
    %v581 = vpop.f32.mrf.mxu0
    %v582 = vadd.f32 %v436, %v581
    %v583 = vpop.f32.mrf.mxu0
    %v584 = vpop.f32.mrf.mxu0
    %v585 = vadd.f32 %v441, %v584
    %v586 = vpop.f32.mrf.mxu0
    %587 = vdwg.mxu0
    %v588 = vmax.f32 %v526, 0.0
    %v589 = vmax.f32 %v529, 0.0
    %v590 = vmax.f32 %v534, 0.0
    %v591 = vmax.f32 %v537, 0.0
    %v592 = vmax.f32 %v542, 0.0
    %v593 = vmax.f32 %v545, 0.0
    %v594 = vmax.f32 %v550, 0.0
    %v595 = vmax.f32 %v553, 0.0
    %v596 = vmax.f32 %v558, 0.0
    %v597 = vmax.f32 %v561, 0.0
    %v598 = vmax.f32 %v566, 0.0
    %v599 = vmax.f32 %v569, 0.0
    %v600 = vmax.f32 %v574, 0.0
    %v601 = vmax.f32 %v577, 0.0
    %v602 = vmax.f32 %v582, 0.0
    %v603 = vmax.f32 %v585, 0.0
    %v604 = vld [vmem:[%s5] sm:$0xf]
    %v605 = vpack.c.bf16 %v589, %v588
    %v606 = vpack.c.bf16 %v591, %v590
    %v607 = vpack.c.bf16 %v593, %v592
    %v608 = vpack.c.bf16 %v595, %v594
    %v609 = vpack.c.bf16 %v597, %v596
    %v610 = vpack.c.bf16 %v599, %v598
    %v611 = vpack.c.bf16 %v601, %v600
    %v612 = vpack.c.bf16 %v603, %v602
    %v613 = vld [vmem:[%s6] sm:$0xff]
    %615 = vset.pattern.permute.xlu0 0
    %616 = vperm.xlu0 %615, %v613
    %v617 = vpop.permute.xlu0 %616
    %619 = vmatprep.subr.bf16.mxu0 0
    %620 = vmatpush1.bf16.msra.mxu0 %v612
    %621 = vmatprep.subr.bf16.mxu0 0
    %622 = vmatpush1.bf16.msra.mxu0 %v611
    %623 = vmatprep.subr.bf16.mxu0 0
    %624 = vmatpush1.bf16.msra.mxu0 %v610
    %625 = vmatprep.subr.bf16.mxu0 0
    %626 = vmatpush1.bf16.msra.mxu0 %v609
    %627 = vmatprep.subr.bf16.mxu0 0
    %628 = vmatpush1.bf16.msra.mxu0 %v608
    %629 = vmatprep.subr.bf16.mxu0 0
    %630 = vmatpush1.bf16.msra.mxu0 %v607
    %631 = vmatprep.subr.bf16.mxu0 0
    %632 = vmatpush1.bf16.msra.mxu0 %v606
    %633 = vmatprep.subr.bf16.mxu0 0
    %634 = vmatpush1.bf16.msra.mxu0 %v605
    %635 = vmatprep.subr.bf16.mxu0 0
    %636 = vmatpush2.bf16.msra.mxu0 0
    %637 = vmatprep.subr.bf16.mxu0 0
    %638 = vmatpush2.bf16.msra.mxu0 0
    %639 = vmatprep.subr.bf16.mxu0 0
    %640 = vmatpush2.bf16.msra.mxu0 0
    %641 = vmatprep.subr.bf16.mxu0 0
    %642 = vmatpush2.bf16.msra.mxu0 0
    %643 = vmatprep.subr.bf16.mxu0 0
    %644 = vmatpush2.bf16.msra.mxu0 0
    %645 = vmatprep.subr.bf16.mxu0 0
    %646 = vmatpush2.bf16.msra.mxu0 0
    %647 = vmatprep.subr.bf16.mxu0 0
    %648 = vmatpush2.bf16.msra.mxu0 0
    %649 = vmatprep.subr.bf16.mxu0 0
    %650 = vmatpush2.bf16.msra.mxu0 0
    %651 = vmatprep.mubr.bf16.mxu0 0
    %652 = vmatmul.mubr.bf16.gmra.mxu0 %v604
    %v653 = vpop.f32.mrf.mxu0
    %v654 = vadd.f32 %v617, %v653
    %v655 = vpop.f32.mrf.mxu0
    %v656 = vpop.f32.mrf.mxu0
    %v657 = vpop.f32.mrf.mxu0
    %658 = vdwg.mxu0
    %659 = vst [vmem:[#allocation2] sm:$0xff] %v654
    // Predicated region
    $region30: #{tpu_custom_call.1} parent=1 // pred_check
      _
    $region31: #{tpu_custom_call.1} parent=1 // pred_check_branch
      %661 = sbr.rel (0) target = $region33
    $region32: #{tpu_custom_call.1} parent=1 // pred_region
      %s663 = ssub.s32 128, 128
      %664 = vsyncadd [#allocation3], %s663
      %s666 = sshll.u32 [#allocation2], 4
      %s667 = int_to_ptr.vmem [resolvable:$true] %s666
      %669 = dma.vmem_to_hbm [thread:$0]  %s667, 128, %s7, [#allocation3]
    $region33: #{tpu_custom_call.1} parent=1 // pred_fallthru
      _
    // Predicated region
    $region34: #{tpu_custom_call.1} parent=1 // pred_check
      _
    $region35: #{tpu_custom_call.1} parent=1 // pred_check_branch
      %671 = sbr.rel (0) target = $region37
    $region36: #{tpu_custom_call.1} parent=1 // pred_region
      %672 = dma.done [#allocation3], 128
    $region37: #{tpu_custom_call.1} parent=1 // pred_fallthru
      _
    %673 = vsyncpa [#allocation3], 1

</llo_original>
